<compile_context>
chip_gen: v5e
topology: v5e:2x2
jax: 0.10.0
libtpu: 0.0.40
codegen_flags: <defaults>
</compile_context>

<pallas_src>
import functools

import jax
import jax.numpy as jnp
from jax.experimental import pallas as pl
from jax.experimental.pallas import tpu as pltpu

LEAKY_SLOPE = 0.01   # F.leaky_relu default
BN_EPS = 1e-5        # nn.BatchNorm1d default
TB_MAX = 2048        # max rows per batch tile (intermediates ~10 MB at 2048)
UNROLL_A_MAX = 32    # unroll actions matmul on the VPU when A <= this


def _leaky_relu(x):
    return jnp.where(x > 0, x, LEAKY_SLOPE * x)


def _round_up(x, m):
    return ((x + m - 1) // m) * m


def _choose_tb(B, tb_max=TB_MAX):
    """Even-split batch tiling: minimal padding, >=2 steps for v7x megacore."""
    n = max(1, pl.cdiv(B, tb_max))
    if B > 256:
        n = max(n, 2)              # let v7x shard the batch across its 2 TCs
    # Round to 16 so bf16 (16,128) sublane packing is always clean.
    return _round_up(pl.cdiv(B, n), 16)


def critic_kernel(s_ref, a_ref,                  # (TB, S) bf16, (TB, A) bf16
                  w1_ref, b1_ref,                # (S, F1) bf16, (1, F1) f32 (BN folded in)
                  w2s_ref, w2a_ref, b2_ref,      # (F1, F2) bf16, (A, F2) f32|bf16, (1, F2) f32
                  w3_ref, b3_ref,                # (F2, F3) bf16, (1, F3) f32
                  w4_ref, b4_ref,                # (1, F3) bf16, (1, 1) f32
                  out_ref,                       # (1, TB) f32  -- lane-dense row
                  *, unroll_actions):
    bf16 = jnp.bfloat16

    # ---- fc1 (BN already folded into w1/b1) + leaky_relu ----
    xs = jnp.dot(s_ref[...], w1_ref[...],
                 preferred_element_type=jnp.float32) + b1_ref[...]
    xs = _leaky_relu(xs)

    # ---- fc2 on concat([xs, actions]) folded into matmul + action epilogue ----
    h2 = jnp.dot(xs.astype(bf16), w2s_ref[...],
                 preferred_element_type=jnp.float32) + b2_ref[...]
    if unroll_actions:
        # Tiny-K contraction on the VPU (broadcast multiply-adds); the MXU
        # would burn a full block pass for ~3% of the flops.
        a = a_ref[...].astype(jnp.float32)                 # (TB, A)
        for i in range(a.shape[1]):
            h2 = h2 + a[:, i:i + 1] * w2a_ref[i:i + 1, :]  # (TB,1)*(1,F2)
    else:
        h2 = h2 + jnp.dot(a_ref[...], w2a_ref[...],
                          preferred_element_type=jnp.float32)
    h2 = _leaky_relu(h2)

    # ---- fc3 + leaky_relu ----
    h3 = jnp.dot(h2.astype(bf16), w3_ref[...],
                 preferred_element_type=jnp.float32) + b3_ref[...]
    h3 = _leaky_relu(h3)

    # ---- fc4: transposed dot -> lane-dense (1, TB) row ----
    q = jax.lax.dot_general(w4_ref[...], h3.astype(bf16),
                            dimension_numbers=(((1,), (1,)), ((), ())),
                            preferred_element_type=jnp.float32)
    out_ref[...] = q + b4_ref[...]


@functools.partial(jax.jit, static_argnames=("tb",))
def critic_forward(states, actions, params, *, tb=None):
    """states: (B, state_size) f32, actions: (B, action_size) f32 -> (B, 1) f32."""
    states = jnp.atleast_2d(states).astype(jnp.float32)
    actions = jnp.atleast_2d(actions).astype(jnp.float32)
    B, S = states.shape
    A = actions.shape[1]

    (w1, b1, w2s, w2a, b2, w3, b3, w4, b4) = params
    F1 = w1.shape[1]
    F2 = w2s.shape[1]
    F3 = w3.shape[1]

    # ---- BatchNorm batch statistics (training-mode, biased variance),
    #      folded into fc1 in f32, then cast once to bf16 ----
    mean = jnp.mean(states, axis=0, keepdims=True)
    var = jnp.mean((states - mean) ** 2, axis=0, keepdims=True)
    scale = jax.lax.rsqrt(var + BN_EPS)                       # (1, S)
    shift = -mean * scale                                     # (1, S)
    w1_fold = w1 * scale.reshape(S, 1)                        # (S, F1) f32
    b1_fold = b1 + shift @ w1                                 # (1, F1) f32

    # ---- batch tiling (BN stats computed before padding) ----
    if tb is None:
        tb = _choose_tb(B)
    grid_n = pl.cdiv(B, tb)
    Bp = grid_n * tb

    states_bf = states.astype(jnp.bfloat16)
    actions_bf = actions.astype(jnp.bfloat16)
    if Bp != B:
        states_bf = jnp.pad(states_bf, ((0, Bp - B), (0, 0)))
        actions_bf = jnp.pad(actions_bf, ((0, Bp - B), (0, 0)))

    # ---- weights: bf16 for the MXU, biases f32; tiny action weight stays f32
    #      when we unroll it on the VPU ----
    unroll_actions = A <= UNROLL_A_MAX
    w1_bf = w1_fold.astype(jnp.bfloat16)
    w2s_bf = w2s.astype(jnp.bfloat16)
    w2a_k = w2a.astype(jnp.float32 if unroll_actions else jnp.bfloat16)
    w3_bf = w3.astype(jnp.bfloat16)
    w4_row = w4.reshape(1, F3).astype(jnp.bfloat16)           # (1, F3)
    b4_2d = b4.reshape(1, 1).astype(jnp.float32)

    tile = lambda shape: pl.BlockSpec(shape, lambda i: (i, 0))     # streamed per tile
    const = lambda shape: pl.BlockSpec(shape, lambda i: (0, 0))    # resident weights

    in_specs = [
        tile((tb, S)),            # states (bf16)
        tile((tb, A)),            # actions (bf16)
        const((S, F1)),  const((1, F1)),                  # w1(BN-folded), b1
        const((F1, F2)), const((A, F2)), const((1, F2)),  # w2s, w2a, b2
        const((F2, F3)), const((1, F3)),                  # w3, b3
        const((1, F3)),  const((1, 1)),                   # w4_row, b4
    ]
    out_spec = pl.BlockSpec((1, tb), lambda i: (i, 0))    # lane-dense row per tile

    flops = 2 * Bp * (S * F1 + F1 * F2 + A * F2 + F2 * F3 + F3)
    bytes_accessed = (
        2 * Bp * (S + A)                                      # bf16 activations in
        + 4 * Bp                                              # f32 output
        + 2 * (S * F1 + F1 * F2 + F2 * F3 + F3)               # bf16 weights
        + 4 * (A * F2 + F1 + F2 + F3 + 1)                     # f32 w2a + biases
    )

    out = pl.pallas_call(
        functools.partial(critic_kernel, unroll_actions=unroll_actions),
        out_shape=jax.ShapeDtypeStruct((grid_n, tb), jnp.float32),
        grid=(grid_n,),
        in_specs=in_specs,
        out_specs=out_spec,
        compiler_params=pltpu.CompilerParams(
            dimension_semantics=("parallel",),
            vmem_limit_bytes=32 * 1024 * 1024,
        ),
        cost_estimate=pl.CostEstimate(
            flops=flops, transcendentals=0, bytes_accessed=bytes_accessed),
    )(states_bf, actions_bf,
      w1_bf, b1_fold, w2s_bf, w2a_k, b2, w3_bf, b3, w4_row, b4_2d)

    return out.reshape(Bp)[:B].reshape(B, 1)


def init_params(key, state_size, action_size, fc1_units=256, fc2_units=256,
                fc3_units=128):
    """Parameter init mirroring the module's shapes.

    PyTorch Linear weights are (out, in); we store them transposed as
    (in, out). fc2's weight is split along its input axis into the fc1-part
    and the action-part so no concat is needed in the kernel.
    """
    ks = jax.random.split(key, 9)

    def u(k, shape, lim):
        return jax.random.uniform(k, shape, jnp.float32, -lim, lim)

    # hidden_init in the reference uses fan_in = weight.size()[0] = out_features
    w1 = u(ks[0], (state_size, fc1_units), 1.0 / jnp.sqrt(fc1_units))
    b1 = u(ks[1], (1, fc1_units), 1.0 / jnp.sqrt(state_size))

    w2s = u(ks[2], (fc1_units, fc2_units), 1.0 / jnp.sqrt(fc2_units))
    w2a = u(ks[3], (action_size, fc2_units), 1.0 / jnp.sqrt(fc2_units))
    b2 = u(ks[4], (1, fc2_units), 1.0 / jnp.sqrt(fc1_units + action_size))

    w3 = u(ks[5], (fc2_units, fc3_units), 1.0 / jnp.sqrt(fc3_units))
    b3 = u(ks[6], (1, fc3_units), 1.0 / jnp.sqrt(fc2_units))

    w4 = u(ks[7], (fc3_units, 1), 0.003)
    b4 = u(ks[8], (1, 1), 1.0 / jnp.sqrt(fc3_units))

    return (w1, b1, w2s, w2a, b2, w3, b3, w4, b4)


def _reference(states, actions, params):
    """Pure-JAX reference with matching dtype choices (bf16 dots, f32 acc)."""
    (w1, b1, w2s, w2a, b2, w3, b3, w4, b4) = params
    states = jnp.atleast_2d(states)
    actions = jnp.atleast_2d(actions)
    bf = jnp.bfloat16

    mean = jnp.mean(states, axis=0, keepdims=True)
    var = jnp.mean((states - mean) ** 2, axis=0, keepdims=True)
    s = (states - mean) * jax.lax.rsqrt(var + BN_EPS)

    xs = jax.nn.leaky_relu(
        jnp.dot(s.astype(bf), w1.astype(bf),
                preferred_element_type=jnp.float32) + b1, LEAKY_SLOPE)
    h2 = jax.nn.leaky_relu(
        jnp.dot(xs.astype(bf), w2s.astype(bf),
                preferred_element_type=jnp.float32)
        + jnp.dot(actions.astype(bf), w2a.astype(bf),
                  preferred_element_type=jnp.float32)
        + b2, LEAKY_SLOPE)
    h3 = jax.nn.leaky_relu(
        jnp.dot(h2.astype(bf), w3.astype(bf),
                preferred_element_type=jnp.float32) + b3, LEAKY_SLOPE)
    return jnp.dot(h3.astype(bf), w4.astype(bf),
                   preferred_element_type=jnp.float32) + b4.reshape(1, 1)


if __name__ == "__main__":
    key = jax.random.PRNGKey(0)
    k_s, k_a, k_p = jax.random.split(key, 3)

    batch = 8
    state_size = 32
    action_size = 8

    states = jax.random.normal(k_s, (batch, state_size), jnp.float32)
    actions = jax.random.normal(k_a, (batch, action_size), jnp.float32)
    params = init_params(k_p, state_size, action_size)

    out = critic_forward(states, actions, params)
    out = jax.block_until_ready(out)

    ref = _reference(states, actions, params)
    assert out.shape == (batch, 1), out.shape
    assert jnp.allclose(out, ref, atol=2e-2, rtol=2e-2), (out, ref)

    print("KERNEL_OK")
</pallas_src>

<mosaic_0001>
module attributes {stable_mosaic.version = 11 : i64} {
  func.func @critic_kernel(%arg0: i32, %arg1: memref<16x32xbf16, #tpu.memory_space<vmem>>, %arg2: memref<16x8xbf16, #tpu.memory_space<vmem>>, %arg3: memref<32x256xbf16, #tpu.memory_space<vmem>>, %arg4: memref<1x256xf32, #tpu.memory_space<vmem>>, %arg5: memref<256x256xbf16, #tpu.memory_space<vmem>>, %arg6: memref<8x256xf32, #tpu.memory_space<vmem>>, %arg7: memref<1x256xf32, #tpu.memory_space<vmem>>, %arg8: memref<256x128xbf16, #tpu.memory_space<vmem>>, %arg9: memref<1x128xf32, #tpu.memory_space<vmem>>, %arg10: memref<1x128xbf16, #tpu.memory_space<vmem>>, %arg11: memref<1x1xf32, #tpu.memory_space<vmem>>, %arg12: memref<1x16xf32, #tpu.memory_space<vmem>>) attributes {dimension_semantics = [#tpu.dimension_semantics<parallel>], iteration_bounds = array<i64: 1>, scalar_prefetch = 0 : i64, scratch_operands = 0 : i64, tpu.core_type = #tpu.core_type<tc>, window_params = [{transform_indices = @transform_0, window_bounds = array<i64: 16, 32>}, {transform_indices = @transform_1, window_bounds = array<i64: 16, 8>}, {pipeline_mode = #tpu.pipeline_mode<synchronous>, transform_indices = @transform_2, window_bounds = array<i64: 32, 256>}, {pipeline_mode = #tpu.pipeline_mode<synchronous>, transform_indices = @transform_3, window_bounds = array<i64: 1, 256>}, {pipeline_mode = #tpu.pipeline_mode<synchronous>, transform_indices = @transform_4, window_bounds = array<i64: 256, 256>}, {pipeline_mode = #tpu.pipeline_mode<synchronous>, transform_indices = @transform_5, window_bounds = array<i64: 8, 256>}, {pipeline_mode = #tpu.pipeline_mode<synchronous>, transform_indices = @transform_6, window_bounds = array<i64: 1, 256>}, {pipeline_mode = #tpu.pipeline_mode<synchronous>, transform_indices = @transform_7, window_bounds = array<i64: 256, 128>}, {pipeline_mode = #tpu.pipeline_mode<synchronous>, transform_indices = @transform_8, window_bounds = array<i64: 1, 128>}, {pipeline_mode = #tpu.pipeline_mode<synchronous>, transform_indices = @transform_9, window_bounds = array<i64: 1, 128>}, {pipeline_mode = #tpu.pipeline_mode<synchronous>, transform_indices = @transform_10, window_bounds = array<i64: 1, 1>}, {transform_indices = @transform_11, window_bounds = array<i64: 1, 16>}]} {
    %c0 = arith.constant 0 : index
    %c0_0 = arith.constant 0 : index
    %0 = vector.load %arg1[%c0, %c0_0] : memref<16x32xbf16, #tpu.memory_space<vmem>>, vector<16x32xbf16>
    %c0_1 = arith.constant 0 : index
    %c0_2 = arith.constant 0 : index
    %1 = vector.load %arg3[%c0_1, %c0_2] : memref<32x256xbf16, #tpu.memory_space<vmem>>, vector<32x256xbf16>
    %cst = arith.constant dense<0.000000e+00> : vector<16x256xf32>
    %2 = tpu.matmul %0, %1, %cst {dimension_numbers = #tpu.dot_dimension_numbers<[1], [0], [0], [1], [0, 0, 1, 1], [], []>} : vector<16x32xbf16>, vector<32x256xbf16>, vector<16x256xf32> -> vector<16x256xf32>
    %c0_3 = arith.constant 0 : index
    %c0_4 = arith.constant 0 : index
    %3 = vector.load %arg4[%c0_3, %c0_4] : memref<1x256xf32, #tpu.memory_space<vmem>>, vector<1x256xf32>
    %4 = vector.broadcast %3 : vector<1x256xf32> to vector<16x256xf32>
    %5 = arith.addf %2, %4 : vector<16x256xf32>
    %cst_5 = arith.constant 0.000000e+00 : f32
    %6 = vector.broadcast %cst_5 : f32 to vector<16x256xf32>
    %7 = arith.cmpf ogt, %5, %6 : vector<16x256xf32>
    %cst_6 = arith.constant 0.00999999977 : f32
    %8 = vector.broadcast %cst_6 : f32 to vector<16x256xf32>
    %9 = arith.mulf %8, %5 : vector<16x256xf32>
    %10 = arith.select %7, %5, %9 : vector<16x256xi1>, vector<16x256xf32>
    %11 = arith.truncf %10 : vector<16x256xf32> to vector<16x256xbf16>
    %c0_7 = arith.constant 0 : index
    %c0_8 = arith.constant 0 : index
    %12 = vector.load %arg5[%c0_7, %c0_8] : memref<256x256xbf16, #tpu.memory_space<vmem>>, vector<256x256xbf16>
    %cst_9 = arith.constant dense<0.000000e+00> : vector<16x256xf32>
    %13 = tpu.matmul %11, %12, %cst_9 {dimension_numbers = #tpu.dot_dimension_numbers<[1], [0], [0], [1], [0, 0, 1, 1], [], []>} : vector<16x256xbf16>, vector<256x256xbf16>, vector<16x256xf32> -> vector<16x256xf32>
    %c0_10 = arith.constant 0 : index
    %c0_11 = arith.constant 0 : index
    %14 = vector.load %arg7[%c0_10, %c0_11] : memref<1x256xf32, #tpu.memory_space<vmem>>, vector<1x256xf32>
    %15 = vector.broadcast %14 : vector<1x256xf32> to vector<16x256xf32>
    %16 = arith.addf %13, %15 : vector<16x256xf32>
    %c0_12 = arith.constant 0 : index
    %c0_13 = arith.constant 0 : index
    %17 = vector.load %arg2[%c0_12, %c0_13] : memref<16x8xbf16, #tpu.memory_space<vmem>>, vector<16x8xbf16>
    %18 = arith.extf %17 : vector<16x8xbf16> to vector<16x8xf32>
    %19 = vector.extract_strided_slice %18 {offsets = [0, 0], sizes = [16, 1], strides = [1, 1]} : vector<16x8xf32> to vector<16x1xf32>
    %c0_14 = arith.constant 0 : index
    %c0_15 = arith.constant 0 : index
    %20 = vector.load %arg6[%c0_14, %c0_15] : memref<8x256xf32, #tpu.memory_space<vmem>>, vector<1x256xf32>
    %21 = vector.broadcast %19 : vector<16x1xf32> to vector<16x256xf32>
    %22 = vector.broadcast %20 : vector<1x256xf32> to vector<16x256xf32>
    %23 = arith.mulf %21, %22 : vector<16x256xf32>
    %24 = arith.addf %16, %23 : vector<16x256xf32>
    %25 = vector.extract_strided_slice %18 {offsets = [0, 1], sizes = [16, 1], strides = [1, 1]} : vector<16x8xf32> to vector<16x1xf32>
    %c1 = arith.constant 1 : index
    %c0_16 = arith.constant 0 : index
    %26 = vector.load %arg6[%c1, %c0_16] : memref<8x256xf32, #tpu.memory_space<vmem>>, vector<1x256xf32>
    %27 = vector.broadcast %25 : vector<16x1xf32> to vector<16x256xf32>
    %28 = vector.broadcast %26 : vector<1x256xf32> to vector<16x256xf32>
    %29 = arith.mulf %27, %28 : vector<16x256xf32>
    %30 = arith.addf %24, %29 : vector<16x256xf32>
    %31 = vector.extract_strided_slice %18 {offsets = [0, 2], sizes = [16, 1], strides = [1, 1]} : vector<16x8xf32> to vector<16x1xf32>
    %c2 = arith.constant 2 : index
    %c0_17 = arith.constant 0 : index
    %32 = vector.load %arg6[%c2, %c0_17] : memref<8x256xf32, #tpu.memory_space<vmem>>, vector<1x256xf32>
    %33 = vector.broadcast %31 : vector<16x1xf32> to vector<16x256xf32>
    %34 = vector.broadcast %32 : vector<1x256xf32> to vector<16x256xf32>
    %35 = arith.mulf %33, %34 : vector<16x256xf32>
    %36 = arith.addf %30, %35 : vector<16x256xf32>
    %37 = vector.extract_strided_slice %18 {offsets = [0, 3], sizes = [16, 1], strides = [1, 1]} : vector<16x8xf32> to vector<16x1xf32>
    %c3 = arith.constant 3 : index
    %c0_18 = arith.constant 0 : index
    %38 = vector.load %arg6[%c3, %c0_18] : memref<8x256xf32, #tpu.memory_space<vmem>>, vector<1x256xf32>
    %39 = vector.broadcast %37 : vector<16x1xf32> to vector<16x256xf32>
    %40 = vector.broadcast %38 : vector<1x256xf32> to vector<16x256xf32>
    %41 = arith.mulf %39, %40 : vector<16x256xf32>
    %42 = arith.addf %36, %41 : vector<16x256xf32>
    %43 = vector.extract_strided_slice %18 {offsets = [0, 4], sizes = [16, 1], strides = [1, 1]} : vector<16x8xf32> to vector<16x1xf32>
    %c4 = arith.constant 4 : index
    %c0_19 = arith.constant 0 : index
    %44 = vector.load %arg6[%c4, %c0_19] : memref<8x256xf32, #tpu.memory_space<vmem>>, vector<1x256xf32>
    %45 = vector.broadcast %43 : vector<16x1xf32> to vector<16x256xf32>
    %46 = vector.broadcast %44 : vector<1x256xf32> to vector<16x256xf32>
    %47 = arith.mulf %45, %46 : vector<16x256xf32>
    %48 = arith.addf %42, %47 : vector<16x256xf32>
    %49 = vector.extract_strided_slice %18 {offsets = [0, 5], sizes = [16, 1], strides = [1, 1]} : vector<16x8xf32> to vector<16x1xf32>
    %c5 = arith.constant 5 : index
    %c0_20 = arith.constant 0 : index
    %50 = vector.load %arg6[%c5, %c0_20] : memref<8x256xf32, #tpu.memory_space<vmem>>, vector<1x256xf32>
    %51 = vector.broadcast %49 : vector<16x1xf32> to vector<16x256xf32>
    %52 = vector.broadcast %50 : vector<1x256xf32> to vector<16x256xf32>
    %53 = arith.mulf %51, %52 : vector<16x256xf32>
    %54 = arith.addf %48, %53 : vector<16x256xf32>
    %55 = vector.extract_strided_slice %18 {offsets = [0, 6], sizes = [16, 1], strides = [1, 1]} : vector<16x8xf32> to vector<16x1xf32>
    %c6 = arith.constant 6 : index
    %c0_21 = arith.constant 0 : index
    %56 = vector.load %arg6[%c6, %c0_21] : memref<8x256xf32, #tpu.memory_space<vmem>>, vector<1x256xf32>
    %57 = vector.broadcast %55 : vector<16x1xf32> to vector<16x256xf32>
    %58 = vector.broadcast %56 : vector<1x256xf32> to vector<16x256xf32>
    %59 = arith.mulf %57, %58 : vector<16x256xf32>
    %60 = arith.addf %54, %59 : vector<16x256xf32>
    %61 = vector.extract_strided_slice %18 {offsets = [0, 7], sizes = [16, 1], strides = [1, 1]} : vector<16x8xf32> to vector<16x1xf32>
    %c7 = arith.constant 7 : index
    %c0_22 = arith.constant 0 : index
    %62 = vector.load %arg6[%c7, %c0_22] : memref<8x256xf32, #tpu.memory_space<vmem>>, vector<1x256xf32>
    %63 = vector.broadcast %61 : vector<16x1xf32> to vector<16x256xf32>
    %64 = vector.broadcast %62 : vector<1x256xf32> to vector<16x256xf32>
    %65 = arith.mulf %63, %64 : vector<16x256xf32>
    %66 = arith.addf %60, %65 : vector<16x256xf32>
    %cst_23 = arith.constant 0.000000e+00 : f32
    %67 = vector.broadcast %cst_23 : f32 to vector<16x256xf32>
    %68 = arith.cmpf ogt, %66, %67 : vector<16x256xf32>
    %cst_24 = arith.constant 0.00999999977 : f32
    %69 = vector.broadcast %cst_24 : f32 to vector<16x256xf32>
    %70 = arith.mulf %69, %66 : vector<16x256xf32>
    %71 = arith.select %68, %66, %70 : vector<16x256xi1>, vector<16x256xf32>
    %72 = arith.truncf %71 : vector<16x256xf32> to vector<16x256xbf16>
    %c0_25 = arith.constant 0 : index
    %c0_26 = arith.constant 0 : index
    %73 = vector.load %arg8[%c0_25, %c0_26] : memref<256x128xbf16, #tpu.memory_space<vmem>>, vector<256x128xbf16>
    %cst_27 = arith.constant dense<0.000000e+00> : vector<16x128xf32>
    %74 = tpu.matmul %72, %73, %cst_27 {dimension_numbers = #tpu.dot_dimension_numbers<[1], [0], [0], [1], [0, 0, 1, 1], [], []>} : vector<16x256xbf16>, vector<256x128xbf16>, vector<16x128xf32> -> vector<16x128xf32>
    %c0_28 = arith.constant 0 : index
    %c0_29 = arith.constant 0 : index
    %75 = vector.load %arg9[%c0_28, %c0_29] : memref<1x128xf32, #tpu.memory_space<vmem>>, vector<1x128xf32>
    %76 = vector.broadcast %75 : vector<1x128xf32> to vector<16x128xf32>
    %77 = arith.addf %74, %76 : vector<16x128xf32>
    %cst_30 = arith.constant 0.000000e+00 : f32
    %78 = vector.broadcast %cst_30 : f32 to vector<16x128xf32>
    %79 = arith.cmpf ogt, %77, %78 : vector<16x128xf32>
    %cst_31 = arith.constant 0.00999999977 : f32
    %80 = vector.broadcast %cst_31 : f32 to vector<16x128xf32>
    %81 = arith.mulf %80, %77 : vector<16x128xf32>
    %82 = arith.select %79, %77, %81 : vector<16x128xi1>, vector<16x128xf32>
    %c0_32 = arith.constant 0 : index
    %c0_33 = arith.constant 0 : index
    %83 = vector.load %arg10[%c0_32, %c0_33] : memref<1x128xbf16, #tpu.memory_space<vmem>>, vector<1x128xbf16>
    %84 = arith.truncf %82 : vector<16x128xf32> to vector<16x128xbf16>
    %cst_34 = arith.constant dense<0.000000e+00> : vector<1x16xf32>
    %85 = tpu.matmul %83, %84, %cst_34 {dimension_numbers = #tpu.dot_dimension_numbers<[1], [1], [0], [0], [0, 0, 1, 0], [], []>} : vector<1x128xbf16>, vector<16x128xbf16>, vector<1x16xf32> -> vector<1x16xf32>
    %c0_35 = arith.constant 0 : index
    %c0_36 = arith.constant 0 : index
    %86 = vector.load %arg11[%c0_35, %c0_36] : memref<1x1xf32, #tpu.memory_space<vmem>>, vector<1x1xf32>
    %87 = vector.broadcast %86 : vector<1x1xf32> to vector<1x16xf32>
    %88 = arith.addf %85, %87 : vector<1x16xf32>
    %c0_37 = arith.constant 0 : index
    %c0_38 = arith.constant 0 : index
    %89 = vector.load %arg12[%c0_37, %c0_38] : memref<1x16xf32, #tpu.memory_space<vmem>>, vector<1x16xf32>
    tpu.vector_store %arg12[%c0_37, %c0_38], %88 {strides = array<i32>} : memref<1x16xf32, #tpu.memory_space<vmem>>, vector<1x16xf32>,
    return
  }
  func.func @transform_0(%arg0: i32) -> (i32, i32) {
    %c0_i32 = arith.constant 0 : i32
    %c0_i32_0 = arith.constant 0 : i32
    return %arg0, %c0_i32 : i32, i32
  }
  func.func @transform_1(%arg0: i32) -> (i32, i32) {
    %c0_i32 = arith.constant 0 : i32
    %c0_i32_0 = arith.constant 0 : i32
    return %arg0, %c0_i32 : i32, i32
  }
  func.func @transform_2(%arg0: i32) -> (i32, i32) {
    %c0_i32 = arith.constant 0 : i32
    %c0_i32_0 = arith.constant 0 : i32
    %c0_i32_1 = arith.constant 0 : i32
    return %c0_i32, %c0_i32_0 : i32, i32
  }
  func.func @transform_3(%arg0: i32) -> (i32, i32) {
    %c0_i32 = arith.constant 0 : i32
    %c0_i32_0 = arith.constant 0 : i32
    %c0_i32_1 = arith.constant 0 : i32
    return %c0_i32, %c0_i32_0 : i32, i32
  }
  func.func @transform_4(%arg0: i32) -> (i32, i32) {
    %c0_i32 = arith.constant 0 : i32
    %c0_i32_0 = arith.constant 0 : i32
    %c0_i32_1 = arith.constant 0 : i32
    return %c0_i32, %c0_i32_0 : i32, i32
  }
  func.func @transform_5(%arg0: i32) -> (i32, i32) {
    %c0_i32 = arith.constant 0 : i32
    %c0_i32_0 = arith.constant 0 : i32
    %c0_i32_1 = arith.constant 0 : i32
    return %c0_i32, %c0_i32_0 : i32, i32
  }
  func.func @transform_6(%arg0: i32) -> (i32, i32) {
    %c0_i32 = arith.constant 0 : i32
    %c0_i32_0 = arith.constant 0 : i32
    %c0_i32_1 = arith.constant 0 : i32
    return %c0_i32, %c0_i32_0 : i32, i32
  }
  func.func @transform_7(%arg0: i32) -> (i32, i32) {
    %c0_i32 = arith.constant 0 : i32
    %c0_i32_0 = arith.constant 0 : i32
    %c0_i32_1 = arith.constant 0 : i32
    return %c0_i32, %c0_i32_0 : i32, i32
  }
  func.func @transform_8(%arg0: i32) -> (i32, i32) {
    %c0_i32 = arith.constant 0 : i32
    %c0_i32_0 = arith.constant 0 : i32
    %c0_i32_1 = arith.constant 0 : i32
    return %c0_i32, %c0_i32_0 : i32, i32
  }
  func.func @transform_9(%arg0: i32) -> (i32, i32) {
    %c0_i32 = arith.constant 0 : i32
    %c0_i32_0 = arith.constant 0 : i32
    %c0_i32_1 = arith.constant 0 : i32
    return %c0_i32, %c0_i32_0 : i32, i32
  }
  func.func @transform_10(%arg0: i32) -> (i32, i32) {
    %c0_i32 = arith.constant 0 : i32
    %c0_i32_0 = arith.constant 0 : i32
    %c0_i32_1 = arith.constant 0 : i32
    return %c0_i32, %c0_i32_0 : i32, i32
  }
  func.func @transform_11(%arg0: i32) -> (i32, i32) {
    %c0_i32 = arith.constant 0 : i32
    %c0_i32_0 = arith.constant 0 : i32
    return %arg0, %c0_i32 : i32, i32
  }
}

</mosaic_0001>

<llo_original>
// kernel: critic_forward.1
$region0: #{critic_forward.1}
  #allocation0 [shape = 'u32[]', space=smem, size = 0x4, offset = 0x4, fixed_abs, tag = 'smem constant byte address 0x4 - core index']
  #allocation1 [shape = 'u32[72,128]{1,0:T(1,128)}', space=vmem, size = 0x9000, scoped, tag = 'internal scratch']
  #allocation2 [shape = 'f32[1,1]{1,0:T(1,128)S(1)}', space=vmem, size = 0x200, scoped, tag = 'scoped memory for critic_forward.1']
  %s0 = inlined_call_operand.vmem [shape: bf16[16,32], index: 0, kind: input, shape index: {}]
  %s1 = inlined_call_operand.vmem [shape: bf16[16,8], index: 1, kind: input, shape index: {}]
  %s2 = inlined_call_operand.vmem [shape: bf16[32,256], index: 2, kind: input, shape index: {}]
  %s3 = inlined_call_operand.vmem [shape: f32[1,256], index: 3, kind: input, shape index: {}]
  %s4 = inlined_call_operand.vmem [shape: bf16[256,256], index: 4, kind: input, shape index: {}]
  %s5 = inlined_call_operand.vmem [shape: f32[8,256], index: 5, kind: input, shape index: {}]
  %s6 = inlined_call_operand.vmem [shape: f32[1,256], index: 6, kind: input, shape index: {}]
  %s7 = inlined_call_operand.vmem [shape: bf16[256,128], index: 7, kind: input, shape index: {}]
  %s8 = inlined_call_operand.vmem [shape: f32[1,128], index: 8, kind: input, shape index: {}]
  %s9 = inlined_call_operand.vmem [shape: bf16[1,128], index: 9, kind: input, shape index: {}]
  %s10 = inlined_call_operand.<no memory space> [shape: f32[1,1], index: 10, kind: input, shape index: {}]
  %s11 = inlined_call_operand.vmem [shape: f32[1,16], index: 11, kind: output, shape index: {}]
  %s12 = sld [smem:[#allocation0]]
  $region54: #{critic_forward.1} parent=0
    _
  %s14 = ssub.s32 1, %s12
  %s15 = scalar_select 0, %s14, %s12
  %v16 = vstv %s10
  %17 = vst [vmem:[#allocation2] sm:$0x1] %v16
  // Predicated region
  $region2: #{critic_forward.1} parent=0 // pred_check
    _
  $region3: #{critic_forward.1} parent=0 // pred_check_branch
    %19 = sbr.rel (0) target = $region5
  $region4: #{critic_forward.1} parent=0 // pred_region
    _
  $region5: #{critic_forward.1} parent=0 // pred_fallthru
    _
  // Predicated region
  $region6: #{critic_forward.1} parent=0 // pred_check
    _
  $region7: #{critic_forward.1} parent=0 // pred_check_branch
    %21 = sbr.rel (0) target = $region9
  $region8: #{critic_forward.1} parent=0 // pred_region
    _
  $region9: #{critic_forward.1} parent=0 // pred_fallthru
    _
  // Predicated region
  $region10: #{critic_forward.1} parent=0 // pred_check
    _
  $region11: #{critic_forward.1} parent=0 // pred_check_branch
    %23 = sbr.rel (0) target = $region13
  $region12: #{critic_forward.1} parent=0 // pred_region
    _
  $region13: #{critic_forward.1} parent=0 // pred_fallthru
    _
  // Predicated region
  $region14: #{critic_forward.1} parent=0 // pred_check
    _
  $region15: #{critic_forward.1} parent=0 // pred_check_branch
    %25 = sbr.rel (0) target = $region17
  $region16: #{critic_forward.1} parent=0 // pred_region
    _
  $region17: #{critic_forward.1} parent=0 // pred_fallthru
    _
  // Predicated region
  $region18: #{critic_forward.1} parent=0 // pred_check
    _
  $region19: #{critic_forward.1} parent=0 // pred_check_branch
    %27 = sbr.rel (0) target = $region21
  $region20: #{critic_forward.1} parent=0 // pred_region
    _
  $region21: #{critic_forward.1} parent=0 // pred_fallthru
    _
  // Predicated region
  $region22: #{critic_forward.1} parent=0 // pred_check
    _
  $region23: #{critic_forward.1} parent=0 // pred_check_branch
    %29 = sbr.rel (0) target = $region25
  $region24: #{critic_forward.1} parent=0 // pred_region
    _
  $region25: #{critic_forward.1} parent=0 // pred_fallthru
    _
  // Predicated region
  $region26: #{critic_forward.1} parent=0 // pred_check
    _
  $region27: #{critic_forward.1} parent=0 // pred_check_branch
    %31 = sbr.rel (0) target = $region29
  $region28: #{critic_forward.1} parent=0 // pred_region
    _
  $region29: #{critic_forward.1} parent=0 // pred_fallthru
    _
  // Predicated region
  $region30: #{critic_forward.1} parent=0 // pred_check
    _
  $region31: #{critic_forward.1} parent=0 // pred_check_branch
    %33 = sbr.rel (0) target = $region33
  $region32: #{critic_forward.1} parent=0 // pred_region
    _
  $region33: #{critic_forward.1} parent=0 // pred_fallthru
    _
  // Predicated region
  $region34: #{critic_forward.1} parent=0 // pred_check
    _
  $region35: #{critic_forward.1} parent=0 // pred_check_branch
    %35 = sbr.rel (0) target = $region37
  $region36: #{critic_forward.1} parent=0 // pred_region
    _
  $region37: #{critic_forward.1} parent=0 // pred_fallthru
    _
  // Predicated region
  $region38: #{critic_forward.1} parent=0 // pred_check
    _
  $region39: #{critic_forward.1} parent=0 // pred_check_branch
    %37 = sbr.rel (0) target = $region41
  $region40: #{critic_forward.1} parent=0 // pred_region
    _
  $region41: #{critic_forward.1} parent=0 // pred_fallthru
    _
  // Predicated region
  $region42: #{critic_forward.1} parent=0 // pred_check
    _
  $region43: #{critic_forward.1} parent=0 // pred_check_branch
    %39 = sbr.rel (0) target = $region45
  $region44: #{critic_forward.1} parent=0 // pred_region
    _
  $region45: #{critic_forward.1} parent=0 // pred_fallthru
    _
  %v41 = vld [vmem:[%s0] sm:$0xf]
  %v42 = vld [vmem:[%s0 + $0x4] sm:$0xf]
  %v43 = vld [vmem:[%s2] sm:$0xff]
  %v44 = vld [vmem:[%s2 + $0x8] sm:$0xff]
  %v45 = vld [vmem:[%s2 + $0x10] sm:$0xff]
  %v46 = vld [vmem:[%s2 + $0x18] sm:$0xff]
  %v47 = vld [vmem:[%s3] sm:$0x3]
  %v49 = vperm.slane %v47, 0
  %v50 = vperm.slane %v47, 1
  %v55 = vunpack.c.l.b16 %v41
  %v56 = vunpack.c.l.b16 %v42
  %v57 = vpack.c.b16 %v56, %v55
  %v62 = vunpack.c.l.b16 %v43
  %v63 = vunpack.c.h.b16 %v43
  %v64 = vunpack.c.l.b16 %v44
  %v65 = vunpack.c.h.b16 %v44
  %v66 = vunpack.c.l.b16 %v45
  %v67 = vunpack.c.h.b16 %v45
  %v68 = vunpack.c.l.b16 %v46
  %v69 = vunpack.c.h.b16 %v46
  %v70 = vpack.c.b16 %v64, %v62
  %v71 = vpack.c.b16 %v65, %v63
  %v72 = vpack.c.b16 %v68, %v66
  %v73 = vpack.c.b16 %v69, %v67
  %vm78 = vcmask 261120
  %v80 = vsel %vm78, %v57, 0
  %82 = vmatpush.bf16.msra.mxu0 0
  %83 = vmatpush.bf16.msra.mxu0 0
  %84 = vmatpush.bf16.msra.mxu0 0
  %85 = vmatpush.bf16.msra.mxu0 0
  %86 = vmatpush.bf16.msra.mxu0 0
  %87 = vmatpush.bf16.msra.mxu0 0
  %88 = vmatpush.bf16.msra.mxu0 %v72
  %89 = vmatpush.bf16.msra.mxu0 %v70
  %90 = vmatmul.bf16.gmra.mxu0 %v80
  %v91 = vpop.f32.mrf.mxu0
  %v92 = vadd.f32 %v49, %v91
  %v93 = vpop.f32.mrf.mxu0
  %v94 = vadd.f32 %v49, %v93
  %95 = vdwg.mxu0
  %96 = vmatpush.bf16.msra.mxu0 0
  %97 = vmatpush.bf16.msra.mxu0 0
  %98 = vmatpush.bf16.msra.mxu0 0
  %99 = vmatpush.bf16.msra.mxu0 0
  %100 = vmatpush.bf16.msra.mxu0 0
  %101 = vmatpush.bf16.msra.mxu0 0
  %102 = vmatpush.bf16.msra.mxu0 %v73
  %103 = vmatpush.bf16.msra.mxu0 %v71
  %104 = vmatmul.bf16.gmra.mxu0 %v80
  %v105 = vpop.f32.mrf.mxu0
  %v106 = vadd.f32 %v50, %v105
  %v107 = vpop.f32.mrf.mxu0
  %v108 = vadd.f32 %v50, %v107
  %109 = vdwg.mxu0
  %vm110 = vcmp.gt.f32.partialorder %v92, 0.0
  %vm111 = vcmp.gt.f32.partialorder %v106, 0.0
  %vm112 = vcmp.gt.f32.partialorder %v94, 0.0
  %vm113 = vcmp.gt.f32.partialorder %v108, 0.0
  %v114 = vmul.f32 %v92, 0.01
  %v115 = vmul.f32 %v106, 0.01
  %v116 = vmul.f32 %v94, 0.01
  %v117 = vmul.f32 %v108, 0.01
  %v118 = vsel %vm110, %v92, %v114
  %v119 = vsel %vm111, %v106, %v115
  %v120 = vsel %vm112, %v94, %v116
  %v121 = vsel %vm113, %v108, %v117
  %v122 = vpack.c.bf16 %v120, %v118
  %v123 = vpack.c.bf16 %v121, %v119
  %v124 = vld [vmem:[%s4] sm:$0xff]
  %v125 = vld [vmem:[%s4 + $0x8] sm:$0xff]
  %v126 = vld [vmem:[%s4 + $0x10] sm:$0xff]
  %v127 = vld [vmem:[%s4 + $0x18] sm:$0xff]
  %v128 = vld [vmem:[%s4 + $0x20] sm:$0xff]
  %v129 = vld [vmem:[%s4 + $0x28] sm:$0xff]
  %v130 = vld [vmem:[%s4 + $0x30] sm:$0xff]
  %v131 = vld [vmem:[%s4 + $0x38] sm:$0xff]
  %v132 = vld [vmem:[%s4 + $0x40] sm:$0xff]
  %v133 = vld [vmem:[%s4 + $0x48] sm:$0xff]
  %v134 = vld [vmem:[%s4 + $0x50] sm:$0xff]
  %v135 = vld [vmem:[%s4 + $0x58] sm:$0xff]
  %v136 = vld [vmem:[%s4 + $0x60] sm:$0xff]
  %v137 = vld [vmem:[%s4 + $0x68] sm:$0xff]
  %v138 = vld [vmem:[%s4 + $0x70] sm:$0xff]
  %v139 = vld [vmem:[%s4 + $0x78] sm:$0xff]
  %v140 = vld [vmem:[%s4 + $0x80] sm:$0xff]
  %v141 = vld [vmem:[%s4 + $0x88] sm:$0xff]
  %v142 = vld [vmem:[%s4 + $0x90] sm:$0xff]
  %v143 = vld [vmem:[%s4 + $0x98] sm:$0xff]
  %v144 = vld [vmem:[%s4 + $0xa0] sm:$0xff]
  %v145 = vld [vmem:[%s4 + $0xa8] sm:$0xff]
  %v146 = vld [vmem:[%s4 + $0xb0] sm:$0xff]
  %v147 = vld [vmem:[%s4 + $0xb8] sm:$0xff]
  %v148 = vld [vmem:[%s4 + $0xc0] sm:$0xff]
  %v149 = vld [vmem:[%s4 + $0xc8] sm:$0xff]
  %v150 = vld [vmem:[%s4 + $0xd0] sm:$0xff]
  %v151 = vld [vmem:[%s4 + $0xd8] sm:$0xff]
  %v152 = vld [vmem:[%s4 + $0xe0] sm:$0xff]
  %v153 = vld [vmem:[%s4 + $0xe8] sm:$0xff]
  %v154 = vld [vmem:[%s4 + $0xf0] sm:$0xff]
  %v155 = vld [vmem:[%s4 + $0xf8] sm:$0xff]
  %v156 = vld [vmem:[%s6] sm:$0x3]
  %v158 = vperm.slane %v156, 0
  %v159 = vperm.slane %v156, 1
  %v194 = vunpack.c.l.b16 %v124
  %v195 = vunpack.c.h.b16 %v124
  %v196 = vunpack.c.l.b16 %v125
  %v197 = vunpack.c.h.b16 %v125
  %v198 = vunpack.c.l.b16 %v126
  %v199 = vunpack.c.h.b16 %v126
  %v200 = vunpack.c.l.b16 %v127
  %v201 = vunpack.c.h.b16 %v127
  %v202 = vunpack.c.l.b16 %v128
  %v203 = vunpack.c.h.b16 %v128
  %v204 = vunpack.c.l.b16 %v129
  %v205 = vunpack.c.h.b16 %v129
  %v206 = vunpack.c.l.b16 %v130
  %v207 = vunpack.c.h.b16 %v130
  %v208 = vunpack.c.l.b16 %v131
  %v209 = vunpack.c.h.b16 %v131
  %v210 = vunpack.c.l.b16 %v132
  %v211 = vunpack.c.h.b16 %v132
  %v212 = vunpack.c.l.b16 %v133
  %v213 = vunpack.c.h.b16 %v133
  %v214 = vunpack.c.l.b16 %v134
  %v215 = vunpack.c.h.b16 %v134
  %v216 = vunpack.c.l.b16 %v135
  %v217 = vunpack.c.h.b16 %v135
  %v218 = vunpack.c.l.b16 %v136
  %v219 = vunpack.c.h.b16 %v136
  %v220 = vunpack.c.l.b16 %v137
  %v221 = vunpack.c.h.b16 %v137
  %v222 = vunpack.c.l.b16 %v138
  %v223 = vunpack.c.h.b16 %v138
  %v224 = vunpack.c.l.b16 %v139
  %v225 = vunpack.c.h.b16 %v139
  %v226 = vunpack.c.l.b16 %v140
  %v227 = vunpack.c.h.b16 %v140
  %v228 = vunpack.c.l.b16 %v141
  %v229 = vunpack.c.h.b16 %v141
  %v230 = vunpack.c.l.b16 %v142
  %v231 = vunpack.c.h.b16 %v142
  %v232 = vunpack.c.l.b16 %v143
  %v233 = vunpack.c.h.b16 %v143
  %v234 = vunpack.c.l.b16 %v144
  %v235 = vunpack.c.h.b16 %v144
  %v236 = vunpack.c.l.b16 %v145
  %v237 = vunpack.c.h.b16 %v145
  %v238 = vunpack.c.l.b16 %v146
  %v239 = vunpack.c.h.b16 %v146
  %v240 = vunpack.c.l.b16 %v147
  %v241 = vunpack.c.h.b16 %v147
  %v242 = vunpack.c.l.b16 %v148
  %v243 = vunpack.c.h.b16 %v148
  %v244 = vunpack.c.l.b16 %v149
  %v245 = vunpack.c.h.b16 %v149
  %v246 = vunpack.c.l.b16 %v150
  %v247 = vunpack.c.h.b16 %v150
  %v248 = vunpack.c.l.b16 %v151
  %v249 = vunpack.c.h.b16 %v151
  %v250 = vunpack.c.l.b16 %v152
  %v251 = vunpack.c.h.b16 %v152
  %v252 = vunpack.c.l.b16 %v153
  %v253 = vunpack.c.h.b16 %v153
  %v254 = vunpack.c.l.b16 %v154
  %v255 = vunpack.c.h.b16 %v154
  %v256 = vunpack.c.l.b16 %v155
  %v257 = vunpack.c.h.b16 %v155
  %v258 = vpack.c.b16 %v196, %v194
  %v259 = vpack.c.b16 %v197, %v195
  %v260 = vpack.c.b16 %v200, %v198
  %v261 = vpack.c.b16 %v201, %v199
  %v262 = vpack.c.b16 %v204, %v202
  %v263 = vpack.c.b16 %v205, %v203
  %v264 = vpack.c.b16 %v208, %v206
  %v265 = vpack.c.b16 %v209, %v207
  %v266 = vpack.c.b16 %v212, %v210
  %v267 = vpack.c.b16 %v213, %v211
  %v268 = vpack.c.b16 %v216, %v214
  %v269 = vpack.c.b16 %v217, %v215
  %v270 = vpack.c.b16 %v220, %v218
  %v271 = vpack.c.b16 %v221, %v219
  %v272 = vpack.c.b16 %v224, %v222
  %v273 = vpack.c.b16 %v225, %v223
  %v274 = vpack.c.b16 %v228, %v226
  %v275 = vpack.c.b16 %v229, %v227
  %v276 = vpack.c.b16 %v232, %v230
  %v277 = vpack.c.b16 %v233, %v231
  %v278 = vpack.c.b16 %v236, %v234
  %v279 = vpack.c.b16 %v237, %v235
  %v280 = vpack.c.b16 %v240, %v238
  %v281 = vpack.c.b16 %v241, %v239
  %v282 = vpack.c.b16 %v244, %v242
  %v283 = vpack.c.b16 %v245, %v243
  %v284 = vpack.c.b16 %v248, %v246
  %v285 = vpack.c.b16 %v249, %v247
  %v286 = vpack.c.b16 %v252, %v250
  %v287 = vpack.c.b16 %v253, %v251
  %v288 = vpack.c.b16 %v256, %v254
  %v289 = vpack.c.b16 %v257, %v255
  %322 = vmatpush.bf16.msra.mxu0 %v272
  %323 = vmatpush.bf16.msra.mxu0 %v270
  %324 = vmatpush.bf16.msra.mxu0 %v268
  %325 = vmatpush.bf16.msra.mxu0 %v266
  %326 = vmatpush.bf16.msra.mxu0 %v264
  %327 = vmatpush.bf16.msra.mxu0 %v262
  %328 = vmatpush.bf16.msra.mxu0 %v260
  %329 = vmatpush.bf16.msra.mxu0 %v258
  %330 = vmatmul.bf16.gmra.mxu0 %v122
  %v331 = vpop.f32.mrf.mxu0
  %v332 = vadd.f32 %v158, %v331
  %v333 = vpop.f32.mrf.mxu0
  %v334 = vadd.f32 %v158, %v333
  %335 = vdwg.mxu0
  %336 = vmatpush.bf16.msra.mxu0 %v288
  %337 = vmatpush.bf16.msra.mxu0 %v286
  %338 = vmatpush.bf16.msra.mxu0 %v284
  %339 = vmatpush.bf16.msra.mxu0 %v282
  %340 = vmatpush.bf16.msra.mxu0 %v280
  %341 = vmatpush.bf16.msra.mxu0 %v278
  %342 = vmatpush.bf16.msra.mxu0 %v276
  %343 = vmatpush.bf16.msra.mxu0 %v274
  %344 = vmatmul.bf16.gmra.mxu0 %v123
  %v345 = vpop.f32.mrf.mxu0
  %v346 = vadd.f32 %v332, %v345
  %v347 = vpop.f32.mrf.mxu0
  %v348 = vadd.f32 %v334, %v347
  %349 = vdwg.mxu0
  %350 = vmatpush.bf16.msra.mxu0 %v273
  %351 = vmatpush.bf16.msra.mxu0 %v271
  %352 = vmatpush.bf16.msra.mxu0 %v269
  %353 = vmatpush.bf16.msra.mxu0 %v267
  %354 = vmatpush.bf16.msra.mxu0 %v265
  %355 = vmatpush.bf16.msra.mxu0 %v263
  %356 = vmatpush.bf16.msra.mxu0 %v261
  %357 = vmatpush.bf16.msra.mxu0 %v259
  %358 = vmatmul.bf16.gmra.mxu0 %v122
  %v359 = vpop.f32.mrf.mxu0
  %v360 = vadd.f32 %v159, %v359
  %v361 = vpop.f32.mrf.mxu0
  %v362 = vadd.f32 %v159, %v361
  %363 = vdwg.mxu0
  %364 = vmatpush.bf16.msra.mxu0 %v289
  %365 = vmatpush.bf16.msra.mxu0 %v287
  %366 = vmatpush.bf16.msra.mxu0 %v285
  %367 = vmatpush.bf16.msra.mxu0 %v283
  %368 = vmatpush.bf16.msra.mxu0 %v281
  %369 = vmatpush.bf16.msra.mxu0 %v279
  %370 = vmatpush.bf16.msra.mxu0 %v277
  %371 = vmatpush.bf16.msra.mxu0 %v275
  %372 = vmatmul.bf16.gmra.mxu0 %v123
  %v373 = vpop.f32.mrf.mxu0
  %v374 = vadd.f32 %v360, %v373
  %v375 = vpop.f32.mrf.mxu0
  %v376 = vadd.f32 %v362, %v375
  %377 = vdwg.mxu0
  %v378 = vld [vmem:[%s1] sm:$0xf]
  %v379 = vld [vmem:[%s1 + $0x4] sm:$0xf]
  %v380 = vunpack.c.l.bf16 %v378
  %v381 = vunpack.c.l.bf16 %v379
  %v382 = vld [vmem:[%s5] ss:$8 sm:$0x3]
  %384 = vset.pattern.permute.xlu0 0
  %385 = vperm.xlu0 %384, %v380
  %v386 = vpop.permute.xlu0 %385
  %389 = vset.pattern.permute.xlu0 0
  %390 = vperm.xlu0 %389, %v381
  %v391 = vpop.permute.xlu0 %390
  %v394 = vperm.slane %v382, 0
  %v395 = vperm.slane %v382, 1
  %v398 = vmul.f32 %v386, %v394
  %v399 = vmul.f32 %v386, %v395
  %v400 = vmul.f32 %v391, %v394
  %v401 = vmul.f32 %v391, %v395
  %v402 = vadd.f32 %v346, %v398
  %v403 = vadd.f32 %v374, %v399
  %v404 = vadd.f32 %v348, %v400
  %v405 = vadd.f32 %v376, %v401
  %s406 = scalar_lea.vmem %s5, 1
  %v407 = vld [vmem:[%s406] ss:$8 sm:$0x3]
  %408 = vset.pattern.permute.xlu0 1
  %409 = vperm.xlu0 %408, %v380
  %v410 = vpop.permute.xlu0 %409
  %412 = vset.pattern.permute.xlu0 1
  %413 = vperm.xlu0 %412, %v381
  %v414 = vpop.permute.xlu0 %413
  %v417 = vperm.slane %v407, 0
  %v418 = vperm.slane %v407, 1
  %v421 = vmul.f32 %v410, %v417
  %v422 = vmul.f32 %v410, %v418
  %v423 = vmul.f32 %v414, %v417
  %v424 = vmul.f32 %v414, %v418
  %v425 = vadd.f32 %v402, %v421
  %v426 = vadd.f32 %v403, %v422
  %v427 = vadd.f32 %v404, %v423
  %v428 = vadd.f32 %v405, %v424
  %s429 = scalar_lea.vmem %s5, 2
  %v430 = vld [vmem:[%s429] ss:$8 sm:$0x3]
  %431 = vset.pattern.permute.xlu0 2
  %432 = vperm.xlu0 %431, %v380
  %v433 = vpop.permute.xlu0 %432
  %435 = vset.pattern.permute.xlu0 2
  %436 = vperm.xlu0 %435, %v381
  %v437 = vpop.permute.xlu0 %436
  %v440 = vperm.slane %v430, 0
  %v441 = vperm.slane %v430, 1
  %v444 = vmul.f32 %v433, %v440
  %v445 = vmul.f32 %v433, %v441
  %v446 = vmul.f32 %v437, %v440
  %v447 = vmul.f32 %v437, %v441
  %v448 = vadd.f32 %v425, %v444
  %v449 = vadd.f32 %v426, %v445
  %v450 = vadd.f32 %v427, %v446
  %v451 = vadd.f32 %v428, %v447
  %s452 = scalar_lea.vmem %s5, 3
  %v453 = vld [vmem:[%s452] ss:$8 sm:$0x3]
  %454 = vset.pattern.permute.xlu0 3
  %455 = vperm.xlu0 %454, %v380
  %v456 = vpop.permute.xlu0 %455
  %458 = vset.pattern.permute.xlu0 3
  %459 = vperm.xlu0 %458, %v381
  %v460 = vpop.permute.xlu0 %459
  %v463 = vperm.slane %v453, 0
  %v464 = vperm.slane %v453, 1
  %v467 = vmul.f32 %v456, %v463
  %v468 = vmul.f32 %v456, %v464
  %v469 = vmul.f32 %v460, %v463
  %v470 = vmul.f32 %v460, %v464
  %v471 = vadd.f32 %v448, %v467
  %v472 = vadd.f32 %v449, %v468
  %v473 = vadd.f32 %v450, %v469
  %v474 = vadd.f32 %v451, %v470
  %s475 = scalar_lea.vmem %s5, 4
  %v476 = vld [vmem:[%s475] ss:$8 sm:$0x3]
  %477 = vset.pattern.permute.xlu0 4
  %478 = vperm.xlu0 %477, %v380
  %v479 = vpop.permute.xlu0 %478
  %481 = vset.pattern.permute.xlu0 4
  %482 = vperm.xlu0 %481, %v381
  %v483 = vpop.permute.xlu0 %482
  %v486 = vperm.slane %v476, 0
  %v487 = vperm.slane %v476, 1
  %v490 = vmul.f32 %v479, %v486
  %v491 = vmul.f32 %v479, %v487
  %v492 = vmul.f32 %v483, %v486
  %v493 = vmul.f32 %v483, %v487
  %v494 = vadd.f32 %v471, %v490
  %v495 = vadd.f32 %v472, %v491
  %v496 = vadd.f32 %v473, %v492
  %v497 = vadd.f32 %v474, %v493
  %s498 = scalar_lea.vmem %s5, 5
  %v499 = vld [vmem:[%s498] ss:$8 sm:$0x3]
  %500 = vset.pattern.permute.xlu0 5
  %501 = vperm.xlu0 %500, %v380
  %v502 = vpop.permute.xlu0 %501
  %504 = vset.pattern.permute.xlu0 5
  %505 = vperm.xlu0 %504, %v381
  %v506 = vpop.permute.xlu0 %505
  %v509 = vperm.slane %v499, 0
  %v510 = vperm.slane %v499, 1
  %v513 = vmul.f32 %v502, %v509
  %v514 = vmul.f32 %v502, %v510
  %v515 = vmul.f32 %v506, %v509
  %v516 = vmul.f32 %v506, %v510
  %v517 = vadd.f32 %v494, %v513
  %v518 = vadd.f32 %v495, %v514
  %v519 = vadd.f32 %v496, %v515
  %v520 = vadd.f32 %v497, %v516
  %s521 = scalar_lea.vmem %s5, 6
  %v522 = vld [vmem:[%s521] ss:$8 sm:$0x3]
  %523 = vset.pattern.permute.xlu0 6
  %524 = vperm.xlu0 %523, %v380
  %v525 = vpop.permute.xlu0 %524
  %527 = vset.pattern.permute.xlu0 6
  %528 = vperm.xlu0 %527, %v381
  %v529 = vpop.permute.xlu0 %528
  %v532 = vperm.slane %v522, 0
  %v533 = vperm.slane %v522, 1
  %v536 = vmul.f32 %v525, %v532
  %v537 = vmul.f32 %v525, %v533
  %v538 = vmul.f32 %v529, %v532
  %v539 = vmul.f32 %v529, %v533
  %v540 = vadd.f32 %v517, %v536
  %v541 = vadd.f32 %v518, %v537
  %v542 = vadd.f32 %v519, %v538
  %v543 = vadd.f32 %v520, %v539
  %s544 = scalar_lea.vmem %s5, 7
  %v545 = vld [vmem:[%s544] ss:$8 sm:$0x3]
  %546 = vset.pattern.permute.xlu0 7
  %547 = vperm.xlu0 %546, %v380
  %v548 = vpop.permute.xlu0 %547
  %550 = vset.pattern.permute.xlu0 7
  %551 = vperm.xlu0 %550, %v381
  %v552 = vpop.permute.xlu0 %551
  %v555 = vperm.slane %v545, 0
  %v556 = vperm.slane %v545, 1
  %v559 = vmul.f32 %v548, %v555
  %v560 = vmul.f32 %v548, %v556
  %v561 = vmul.f32 %v552, %v555
  %v562 = vmul.f32 %v552, %v556
  %v563 = vadd.f32 %v540, %v559
  %v564 = vadd.f32 %v541, %v560
  %v565 = vadd.f32 %v542, %v561
  %v566 = vadd.f32 %v543, %v562
  %vm567 = vcmp.gt.f32.partialorder %v563, 0.0
  %vm568 = vcmp.gt.f32.partialorder %v564, 0.0
  %vm569 = vcmp.gt.f32.partialorder %v565, 0.0
  %vm570 = vcmp.gt.f32.partialorder %v566, 0.0
  %v571 = vmul.f32 %v563, 0.01
  %v572 = vmul.f32 %v564, 0.01
  %v573 = vmul.f32 %v565, 0.01
  %v574 = vmul.f32 %v566, 0.01
  %v575 = vsel %vm567, %v563, %v571
  %v576 = vsel %vm568, %v564, %v572
  %v577 = vsel %vm569, %v565, %v573
  %v578 = vsel %vm570, %v566, %v574
  %v579 = vpack.c.bf16 %v577, %v575
  %v580 = vpack.c.bf16 %v578, %v576
  %v581 = vld [vmem:[%s7] sm:$0xf]
  %v582 = vld [vmem:[%s7 + $0x4] sm:$0xf]
  %v583 = vld [vmem:[%s7 + $0x8] sm:$0xf]
  %v584 = vld [vmem:[%s7 + $0xc] sm:$0xf]
  %v585 = vld [vmem:[%s7 + $0x10] sm:$0xf]
  %v586 = vld [vmem:[%s7 + $0x14] sm:$0xf]
  %v587 = vld [vmem:[%s7 + $0x18] sm:$0xf]
  %v588 = vld [vmem:[%s7 + $0x1c] sm:$0xf]
  %v589 = vld [vmem:[%s7 + $0x20] sm:$0xf]
  %v590 = vld [vmem:[%s7 + $0x24] sm:$0xf]
  %v591 = vld [vmem:[%s7 + $0x28] sm:$0xf]
  %v592 = vld [vmem:[%s7 + $0x2c] sm:$0xf]
  %v593 = vld [vmem:[%s7 + $0x30] sm:$0xf]
  %v594 = vld [vmem:[%s7 + $0x34] sm:$0xf]
  %v595 = vld [vmem:[%s7 + $0x38] sm:$0xf]
  %v596 = vld [vmem:[%s7 + $0x3c] sm:$0xf]
  %v597 = vld [vmem:[%s7 + $0x40] sm:$0xf]
  %v598 = vld [vmem:[%s7 + $0x44] sm:$0xf]
  %v599 = vld [vmem:[%s7 + $0x48] sm:$0xf]
  %v600 = vld [vmem:[%s7 + $0x4c] sm:$0xf]
  %v601 = vld [vmem:[%s7 + $0x50] sm:$0xf]
  %v602 = vld [vmem:[%s7 + $0x54] sm:$0xf]
  %v603 = vld [vmem:[%s7 + $0x58] sm:$0xf]
  %v604 = vld [vmem:[%s7 + $0x5c] sm:$0xf]
  %v605 = vld [vmem:[%s7 + $0x60] sm:$0xf]
  %v606 = vld [vmem:[%s7 + $0x64] sm:$0xf]
  %v607 = vld [vmem:[%s7 + $0x68] sm:$0xf]
  %v608 = vld [vmem:[%s7 + $0x6c] sm:$0xf]
  %v609 = vld [vmem:[%s7 + $0x70] sm:$0xf]
  %v610 = vld [vmem:[%s7 + $0x74] sm:$0xf]
  %v611 = vld [vmem:[%s7 + $0x78] sm:$0xf]
  %v612 = vld [vmem:[%s7 + $0x7c] sm:$0xf]
  %v613 = vld [vmem:[%s8] sm:$0x1]
  %v615 = vperm.slane %v613, 0
  %v649 = vunpack.c.l.b16 %v581
  %v650 = vunpack.c.l.b16 %v582
  %v651 = vunpack.c.l.b16 %v583
  %v652 = vunpack.c.l.b16 %v584
  %v653 = vunpack.c.l.b16 %v585
  %v654 = vunpack.c.l.b16 %v586
  %v655 = vunpack.c.l.b16 %v587
  %v656 = vunpack.c.l.b16 %v588
  %v657 = vunpack.c.l.b16 %v589
  %v658 = vunpack.c.l.b16 %v590
  %v659 = vunpack.c.l.b16 %v591
  %v660 = vunpack.c.l.b16 %v592
  %v661 = vunpack.c.l.b16 %v593
  %v662 = vunpack.c.l.b16 %v594
  %v663 = vunpack.c.l.b16 %v595
  %v664 = vunpack.c.l.b16 %v596
  %v665 = vunpack.c.l.b16 %v597
  %v666 = vunpack.c.l.b16 %v598
  %v667 = vunpack.c.l.b16 %v599
  %v668 = vunpack.c.l.b16 %v600
  %v669 = vunpack.c.l.b16 %v601
  %v670 = vunpack.c.l.b16 %v602
  %v671 = vunpack.c.l.b16 %v603
  %v672 = vunpack.c.l.b16 %v604
  %v673 = vunpack.c.l.b16 %v605
  %v674 = vunpack.c.l.b16 %v606
  %v675 = vunpack.c.l.b16 %v607
  %v676 = vunpack.c.l.b16 %v608
  %v677 = vunpack.c.l.b16 %v609
  %v678 = vunpack.c.l.b16 %v610
  %v679 = vunpack.c.l.b16 %v611
  %v680 = vunpack.c.l.b16 %v612
  %v681 = vpack.c.b16 %v650, %v649
  %v682 = vpack.c.b16 %v652, %v651
  %v683 = vpack.c.b16 %v654, %v653
  %v684 = vpack.c.b16 %v656, %v655
  %v685 = vpack.c.b16 %v658, %v657
  %v686 = vpack.c.b16 %v660, %v659
  %v687 = vpack.c.b16 %v662, %v661
  %v688 = vpack.c.b16 %v664, %v663
  %v689 = vpack.c.b16 %v666, %v665
  %v690 = vpack.c.b16 %v668, %v667
  %v691 = vpack.c.b16 %v670, %v669
  %v692 = vpack.c.b16 %v672, %v671
  %v693 = vpack.c.b16 %v674, %v673
  %v694 = vpack.c.b16 %v676, %v675
  %v695 = vpack.c.b16 %v678, %v677
  %v696 = vpack.c.b16 %v680, %v679
  %713 = vmatpush.bf16.msra.mxu0 %v688
  %714 = vmatpush.bf16.msra.mxu0 %v687
  %715 = vmatpush.bf16.msra.mxu0 %v686
  %716 = vmatpush.bf16.msra.mxu0 %v685
  %717 = vmatpush.bf16.msra.mxu0 %v684
  %718 = vmatpush.bf16.msra.mxu0 %v683
  %719 = vmatpush.bf16.msra.mxu0 %v682
  %720 = vmatpush.bf16.msra.mxu0 %v681
  %721 = vmatmul.bf16.gmra.mxu0 %v579
  %v722 = vpop.f32.mrf.mxu0
  %v723 = vadd.f32 %v615, %v722
  %v724 = vpop.f32.mrf.mxu0
  %v725 = vadd.f32 %v615, %v724
  %726 = vdwg.mxu0
  %727 = vmatpush.bf16.msra.mxu0 %v696
  %728 = vmatpush.bf16.msra.mxu0 %v695
  %729 = vmatpush.bf16.msra.mxu0 %v694
  %730 = vmatpush.bf16.msra.mxu0 %v693
  %731 = vmatpush.bf16.msra.mxu0 %v692
  %732 = vmatpush.bf16.msra.mxu0 %v691
  %733 = vmatpush.bf16.msra.mxu0 %v690
  %734 = vmatpush.bf16.msra.mxu0 %v689
  %735 = vmatmul.bf16.gmra.mxu0 %v580
  %v736 = vpop.f32.mrf.mxu0
  %v737 = vadd.f32 %v723, %v736
  %v738 = vpop.f32.mrf.mxu0
  %v739 = vadd.f32 %v725, %v738
  %740 = vdwg.mxu0
  %vm741 = vcmp.gt.f32.partialorder %v737, 0.0
  %vm742 = vcmp.gt.f32.partialorder %v739, 0.0
  %v743 = vmul.f32 %v737, 0.01
  %v744 = vmul.f32 %v739, 0.01
  %v745 = vsel %vm741, %v737, %v743
  %v746 = vsel %vm742, %v739, %v744
  %v747 = vld [vmem:[%s9] sm:$0x1]
  %v748 = vpack.c.bf16 %v746, %v745
  %v749 = vld [vmem:[#allocation2] sm:$0x1]
  %751 = vset.pattern.permute.xlu0 0
  %752 = vperm.xlu0 %751, %v749
  %v753 = vpop.permute.xlu0 %752
  %v755 = vperm.slane %v753, 0
  %756 = vmatpush.bf16.xpose.msra.mxu0 0
  %757 = vmatpush.bf16.xpose.msra.mxu0 0
  %758 = vmatpush.bf16.xpose.msra.mxu0 0
  %759 = vmatpush.bf16.xpose.msra.mxu0 0
  %760 = vmatpush.bf16.xpose.msra.mxu0 0
  %761 = vmatpush.bf16.xpose.msra.mxu0 0
  %762 = vmatpush.bf16.xpose.msra.mxu0 0
  %763 = vmatpush.bf16.xpose.msra.mxu0 %v748
  %764 = vmatmul.bf16.gmra.mxu0 %v747
  %v765 = vpop.f32.mrf.mxu0
  %v766 = vadd.f32 %v755, %v765
  %v767 = vpop.f32.mrf.mxu0
  %768 = vdwg.mxu0
  %vm769 = vcmask 122880
  %770 = vst.msk [vmem:[%s11] sm:$0x1] %vm769, %v766
  // Predicated region
  $region46: #{critic_forward.1} parent=0 // pred_check
    _
  $region47: #{critic_forward.1} parent=0 // pred_check_branch
    %772 = sbr.rel (0) target = $region49
  $region48: #{critic_forward.1} parent=0 // pred_region
    _
  $region49: #{critic_forward.1} parent=0 // pred_fallthru
    _
  // Predicated region
  $region50: #{critic_forward.1} parent=0 // pred_check
    _
  $region51: #{critic_forward.1} parent=0 // pred_check_branch
    %774 = sbr.rel (0) target = $region53
  $region52: #{critic_forward.1} parent=0 // pred_region
    _
  $region53: #{critic_forward.1} parent=0 // pred_fallthru
    _

</llo_original>
